<compile_context>
chip_gen: v7x
topology: tpu7x:2x2x1
jax: 0.10.0
libtpu: 0.0.40
codegen_flags: <defaults>
</compile_context>

<pallas_src>
import functools
import math

import jax
import jax.numpy as jnp
from jax.experimental import pallas as pl
from jax.experimental.pallas import tpu as pltpu


def _round_up(x, m):
    return ((x + m - 1) // m) * m


def _maxout_kernel(x_ref, w_ref, b_ref, o_ref, *, pool_size, tn):
    # x_ref: (tm, d_in)   w_ref: (d_in, pool*tn)   b_ref: (1, pool*tn)
    # o_ref: (tm, tn)
    y = jnp.dot(x_ref[...], w_ref[...], preferred_element_type=jnp.float32)
    y = y + b_ref[...].astype(jnp.float32)           # single broadcast + add
    m = y[:, 0:tn]
    for p in range(1, pool_size):                    # static, lane-aligned slices
        m = jnp.maximum(m, y[:, p * tn:(p + 1) * tn])
    o_ref[...] = m.astype(o_ref.dtype)


def maxout_ghosh2017(x, weight, bias, d_out, pool_size, *,
                     tile_rows=512, tile_cols=256):
    """x: (..., d_in); weight: (d_out*pool_size, d_in); bias: (d_out*pool_size,)."""
    # TODO(synk): add a K (d_in) grid axis with per-pool f32 scratch accumulators
    # (pl.when finalize) for very large d_in on v7x's 64 MiB VMEM.
    d_in = x.shape[-1]
    lead_shape = x.shape[:-1]
    n = math.prod(lead_shape) if lead_shape else 1
    x_flat = x.reshape(n, d_in)

    # ---- tiling --------------------------------------------------------------
    tm = min(tile_rows, _round_up(n, 8))          # rows per grid step (mult of 8)
    n_pad = _round_up(n, tm)
    if n_pad != n:
        x_flat = jnp.pad(x_flat, ((0, n_pad - n), (0, 0)))

    d_out_p = _round_up(d_out, 128)               # lane-dense output columns
    tn = min(_round_up(tile_cols, 128), d_out_p)
    while d_out_p % tn != 0:                      # tn must divide d_out_p
        tn -= 128
    n_ot = d_out_p // tn

    # ---- parameter re-layout (pool fused along lanes, grouped per col tile) ---
    # PyTorch weight row j = o*pool_size + p  ->  output column o, pool slot p.
    w = weight.reshape(d_out, pool_size, d_in)               # [o, p, i]
    w = jnp.transpose(w, (2, 1, 0))                          # [i, p, o]
    w = jnp.pad(w, ((0, 0), (0, 0), (0, d_out_p - d_out)))   # pad o -> d_out_p
    w = w.reshape(d_in, pool_size, n_ot, tn)
    w_fused = jnp.transpose(w, (2, 0, 1, 3)).reshape(n_ot, d_in, pool_size * tn)

    b = bias.reshape(d_out, pool_size)                       # [o, p]
    b = jnp.pad(b, ((0, d_out_p - d_out), (0, 0)))
    b = jnp.transpose(b, (1, 0)).reshape(pool_size, n_ot, tn)
    b_fused = jnp.transpose(b, (1, 0, 2)).reshape(n_ot, 1, pool_size * tn)

    # ---- pallas call ----------------------------------------------------------
    grid = (n_pad // tm, n_ot)
    kernel = functools.partial(_maxout_kernel, pool_size=pool_size, tn=tn)

    elt = jnp.dtype(x.dtype).itemsize
    vmem_need = 2 * (tm * d_in * elt
                     + d_in * pool_size * tn * 4
                     + pool_size * tn * 4
                     + tm * tn * elt) + (2 << 20)
    vmem_limit = min(max(vmem_need, 32 << 20), 64 << 20)

    out_pad = pl.pallas_call(
        kernel,
        out_shape=jax.ShapeDtypeStruct((n_pad, d_out_p), x.dtype),
        grid_spec=pltpu.PrefetchScalarGridSpec(
            num_scalar_prefetch=0,
            grid=grid,
            in_specs=[
                pl.BlockSpec((tm, d_in), lambda i, j: (i, 0)),
                pl.BlockSpec((None, d_in, pool_size * tn), lambda i, j: (j, 0, 0)),
                pl.BlockSpec((None, 1, pool_size * tn), lambda i, j: (j, 0, 0)),
            ],
            out_specs=pl.BlockSpec((tm, tn), lambda i, j: (i, j)),
        ),
        compiler_params=pltpu.CompilerParams(
            dimension_semantics=("parallel", "parallel"),
            vmem_limit_bytes=vmem_limit,
        ),
    )(x_flat, w_fused, b_fused)

    out = out_pad[:n, :d_out]
    return out.reshape(*lead_shape, d_out)


def _reference(x, weight, bias, d_out, pool_size):
    y = jnp.einsum("...i,oi->...o", x, weight) + bias
    y = y.reshape(*y.shape[:-1], d_out, pool_size)
    return jnp.max(y, axis=-1)


if __name__ == "__main__":
    # Module hyperparameters (small, consistent with the forward pass).
    d_in, d_out, pool_size = 32, 16, 4
    batch, seq = 2, 8  # x: (batch, seq, d_in) -> out: (batch, seq, d_out)

    key = jax.random.PRNGKey(0)
    kx, kw, kb = jax.random.split(key, 3)

    x = jax.random.normal(kx, (batch, seq, d_in), dtype=jnp.float32)
    # Deterministic synthetic Linear params (nn.Linear(d_in, d_out*pool_size)).
    bound = 1.0 / (d_in ** 0.5)
    weight = jax.random.uniform(
        kw, (d_out * pool_size, d_in), minval=-bound, maxval=bound,
        dtype=jnp.float32)
    bias = jax.random.uniform(
        kb, (d_out * pool_size,), minval=-bound, maxval=bound,
        dtype=jnp.float32)

    out = maxout_ghosh2017(x, weight, bias, d_out, pool_size)
    out = jax.block_until_ready(out)

    ref = _reference(x, weight, bias, d_out, pool_size)
    assert out.shape == (batch, seq, d_out)
    assert jnp.allclose(out, ref, atol=1e-5, rtol=1e-5), "mismatch vs reference"

    print("KERNEL_OK")
</pallas_src>

<mosaic_0001>
module attributes {stable_mosaic.version = 11 : i64} {
  func.func @_maxout_kernel(%arg0: i32, %arg1: i32, %arg2: memref<16x32xf32, #tpu.memory_space<vmem>>, %arg3: memref<1x32x512xf32, #tpu.memory_space<vmem>>, %arg4: memref<1x1x512xf32, #tpu.memory_space<vmem>>, %arg5: memref<16x128xf32, #tpu.memory_space<vmem>>) attributes {dimension_semantics = [#tpu.dimension_semantics<parallel>, #tpu.dimension_semantics<parallel>], iteration_bounds = array<i64: 1, 1>, scalar_prefetch = 0 : i64, scratch_operands = 0 : i64, tpu.core_type = #tpu.core_type<tc>, window_params = [{transform_indices = @transform_0, window_bounds = array<i64: 16, 32>}, {transform_indices = @transform_1, window_bounds = array<i64: 1, 32, 512>}, {transform_indices = @transform_2, window_bounds = array<i64: 1, 1, 512>}, {transform_indices = @transform_3, window_bounds = array<i64: 16, 128>}]} {
    %c0 = arith.constant 0 : index
    %c0_0 = arith.constant 0 : index
    %0 = vector.load %arg2[%c0, %c0_0] : memref<16x32xf32, #tpu.memory_space<vmem>>, vector<16x32xf32>
    %c0_1 = arith.constant 0 : index
    %c0_2 = arith.constant 0 : index
    %c0_3 = arith.constant 0 : index
    %1 = vector.load %arg3[%c0_1, %c0_2, %c0_3] : memref<1x32x512xf32, #tpu.memory_space<vmem>>, vector<1x32x512xf32>
    %2 = vector.shape_cast %1 : vector<1x32x512xf32> to vector<32x512xf32>
    %cst = arith.constant dense<0.000000e+00> : vector<16x512xf32>
    %3 = tpu.matmul %0, %2, %cst {dimension_numbers = #tpu.dot_dimension_numbers<[1], [0], [0], [1], [0, 0, 1, 1], [], []>} : vector<16x32xf32>, vector<32x512xf32>, vector<16x512xf32> -> vector<16x512xf32>
    %c0_4 = arith.constant 0 : index
    %c0_5 = arith.constant 0 : index
    %c0_6 = arith.constant 0 : index
    %4 = vector.load %arg4[%c0_4, %c0_5, %c0_6] : memref<1x1x512xf32, #tpu.memory_space<vmem>>, vector<1x1x512xf32>
    %5 = vector.shape_cast %4 : vector<1x1x512xf32> to vector<1x512xf32>
    %6 = vector.broadcast %5 : vector<1x512xf32> to vector<16x512xf32>
    %7 = arith.addf %3, %6 : vector<16x512xf32>
    %8 = vector.extract_strided_slice %7 {offsets = [0, 0], sizes = [16, 128], strides = [1, 1]} : vector<16x512xf32> to vector<16x128xf32>
    %9 = vector.extract_strided_slice %7 {offsets = [0, 128], sizes = [16, 128], strides = [1, 1]} : vector<16x512xf32> to vector<16x128xf32>
    %10 = arith.maximumf %8, %9 : vector<16x128xf32>
    %11 = vector.extract_strided_slice %7 {offsets = [0, 256], sizes = [16, 128], strides = [1, 1]} : vector<16x512xf32> to vector<16x128xf32>
    %12 = arith.maximumf %10, %11 : vector<16x128xf32>
    %13 = vector.extract_strided_slice %7 {offsets = [0, 384], sizes = [16, 128], strides = [1, 1]} : vector<16x512xf32> to vector<16x128xf32>
    %14 = arith.maximumf %12, %13 : vector<16x128xf32>
    %c0_7 = arith.constant 0 : index
    %c0_8 = arith.constant 0 : index
    %15 = vector.load %arg5[%c0_7, %c0_8] : memref<16x128xf32, #tpu.memory_space<vmem>>, vector<16x128xf32>
    tpu.vector_store %arg5[%c0_7, %c0_8], %14 {strides = array<i32>} : memref<16x128xf32, #tpu.memory_space<vmem>>, vector<16x128xf32>,
    return
  }
  func.func @transform_0(%arg0: i32, %arg1: i32) -> (i32, i32) {
    %c0_i32 = arith.constant 0 : i32
    %c0_i32_0 = arith.constant 0 : i32
    return %arg0, %c0_i32 : i32, i32
  }
  func.func @transform_1(%arg0: i32, %arg1: i32) -> (i32, i32, i32) {
    %c0_i32 = arith.constant 0 : i32
    %c0_i32_0 = arith.constant 0 : i32
    %c0_i32_1 = arith.constant 0 : i32
    return %arg1, %c0_i32, %c0_i32_0 : i32, i32, i32
  }
  func.func @transform_2(%arg0: i32, %arg1: i32) -> (i32, i32, i32) {
    %c0_i32 = arith.constant 0 : i32
    %c0_i32_0 = arith.constant 0 : i32
    %c0_i32_1 = arith.constant 0 : i32
    return %arg1, %c0_i32, %c0_i32_0 : i32, i32, i32
  }
  func.func @transform_3(%arg0: i32, %arg1: i32) -> (i32, i32) {
    %c0_i32 = arith.constant 0 : i32
    return %arg0, %arg1 : i32, i32
  }
}

</mosaic_0001>

<llo_original>
// kernel: tpu_custom_call.1
$region0: #{tpu_custom_call.1}
  #allocation0 [shape = 'u32[]', space=smem, size = 0x4, offset = 0x4, fixed_abs, tag = 'smem constant byte address 0x4 - core index']
  #allocation1 [shape = 'u32[144,128]{1,0:T(1,128)}', space=vmem, size = 0x12000, scoped, tag = 'internal scratch']
  %s0 = inlined_call_operand.hbm [shape: f32[16,32], index: 0, kind: input, shape index: {}]
  %s1 = inlined_call_operand.hbm [shape: f32[1,32,512], index: 1, kind: input, shape index: {}]
  %s2 = inlined_call_operand.vmem [shape: f32[1,1,512], index: 2, kind: input, shape index: {}]
  %s3 = inlined_call_operand.hbm [shape: f32[16,128], index: 3, kind: output, shape index: {}]
  %s4 = sld [smem:[#allocation0]]
  $region30: #{tpu_custom_call.1} parent=0
    _
  %s6 = ssub.s32 1, %s4
  %s7 = scalar_select 0, %s6, %s4
  $region1: #{tpu_custom_call.1} parent=0
    #allocation2 [shape = 'u8[8192]{0}', space=vmem, size = 0x2000, scoped, tag = 'input window, operand 0, single buffered']
    #allocation3 [shape = 's32[1]{0}', space=sflag, size = 0x4, scoped, tag = 'scoped memory for tpu_custom_call.1']
    #allocation4 [shape = 's32[1]{0}', space=sflag, size = 0x4, scoped, tag = 'scoped memory for tpu_custom_call.1']
    #allocation5 [shape = 'u8[65536]{0}', space=vmem, size = 0x10000, scoped, tag = 'input window, operand 1, single buffered']
    #allocation6 [shape = 's32[1]{0}', space=sflag, size = 0x4, scoped, tag = 'scoped memory for tpu_custom_call.1']
    #allocation7 [shape = 'u8[8192]{0}', space=vmem, size = 0x2000, scoped, tag = 'output window, operand 0, single buffered']
    %8 = vsyncpa [#allocation3], 0
    %9 = vsyncpa [#allocation6], 0
    %10 = vsyncpa [#allocation4], 0
    // Predicated region
    $region2: #{tpu_custom_call.1} parent=1 // pred_check
      _
    $region3: #{tpu_custom_call.1} parent=1 // pred_check_branch
      %12 = sbr.rel (0) target = $region5
    $region4: #{tpu_custom_call.1} parent=1 // pred_region
      %s14 = ssub.s32 256, 256
      %15 = vsyncadd [#allocation3], %s14
      %s16 = sshll.u32 [#allocation2], 4
      %s17 = int_to_ptr.vmem [resolvable:$true] %s16
      %22 = dma.hbm_to_vmem [thread:$0]  %s0, 256, %s17, [#allocation3], 128, 128, 8
    $region5: #{tpu_custom_call.1} parent=1 // pred_fallthru
      _
    // Predicated region
    $region6: #{tpu_custom_call.1} parent=1 // pred_check
      _
    $region7: #{tpu_custom_call.1} parent=1 // pred_check_branch
      %24 = sbr.rel (0) target = $region9
    $region8: #{tpu_custom_call.1} parent=1 // pred_region
      %s26 = ssub.s32 2048, 2048
      %27 = vsyncadd [#allocation6], %s26
      %s28 = sshll.u32 [#allocation5], 4
      %s29 = int_to_ptr.vmem [resolvable:$true] %s28
      %34 = dma.hbm_to_vmem [thread:$0]  %s1, 2048, %s29, [#allocation6], 512, 512, 32
    $region9: #{tpu_custom_call.1} parent=1 // pred_fallthru
      _
    // Predicated region
    $region10: #{tpu_custom_call.1} parent=1 // pred_check
      _
    $region11: #{tpu_custom_call.1} parent=1 // pred_check_branch
      %36 = sbr.rel (0) target = $region13
    $region12: #{tpu_custom_call.1} parent=1 // pred_region
      _
    $region13: #{tpu_custom_call.1} parent=1 // pred_fallthru
      _
    // Predicated region
    $region14: #{tpu_custom_call.1} parent=1 // pred_check
      _
    $region15: #{tpu_custom_call.1} parent=1 // pred_check_branch
      %38 = sbr.rel (0) target = $region17
    $region16: #{tpu_custom_call.1} parent=1 // pred_region
      %39 = dma.done [#allocation3], 256
    $region17: #{tpu_custom_call.1} parent=1 // pred_fallthru
      _
    // Predicated region
    $region18: #{tpu_custom_call.1} parent=1 // pred_check
      _
    $region19: #{tpu_custom_call.1} parent=1 // pred_check_branch
      %41 = sbr.rel (0) target = $region21
    $region20: #{tpu_custom_call.1} parent=1 // pred_region
      %42 = dma.done [#allocation6], 2048
    $region21: #{tpu_custom_call.1} parent=1 // pred_fallthru
      _
    %v43 = vld [vmem:[#allocation2] sm:$0xff]
    %v44 = vld [vmem:[#allocation2 + $0x8] sm:$0xff]
    %v45 = vld [vmem:[#allocation5] sm:$0xff]
    %v46 = vld [vmem:[#allocation5 + $0x8] sm:$0xff]
    %v47 = vld [vmem:[#allocation5 + $0x10] sm:$0xff]
    %v48 = vld [vmem:[#allocation5 + $0x18] sm:$0xff]
    %v49 = vld [vmem:[#allocation5 + $0x20] sm:$0xff]
    %v50 = vld [vmem:[#allocation5 + $0x28] sm:$0xff]
    %v51 = vld [vmem:[#allocation5 + $0x30] sm:$0xff]
    %v52 = vld [vmem:[#allocation5 + $0x38] sm:$0xff]
    %v53 = vld [vmem:[#allocation5 + $0x40] sm:$0xff]
    %v54 = vld [vmem:[#allocation5 + $0x48] sm:$0xff]
    %v55 = vld [vmem:[#allocation5 + $0x50] sm:$0xff]
    %v56 = vld [vmem:[#allocation5 + $0x58] sm:$0xff]
    %v57 = vld [vmem:[#allocation5 + $0x60] sm:$0xff]
    %v58 = vld [vmem:[#allocation5 + $0x68] sm:$0xff]
    %v59 = vld [vmem:[#allocation5 + $0x70] sm:$0xff]
    %v60 = vld [vmem:[#allocation5 + $0x78] sm:$0xff]
    %v61 = vld [vmem:[%s2] sm:$0xf]
    %v63 = vlaneseq
    %v64 = vshrl.u32 %v63, 7
    %v65 = vsub.s32 0, %v64
    %v66 = vrot.slane %v61, %v65
    %v67 = vlaneseq
    %v68 = vshrl.u32 %v67, 7
    %v69 = vsub.s32 1, %v68
    %v70 = vrot.slane %v61, %v69
    %v71 = vlaneseq
    %v72 = vshrl.u32 %v71, 7
    %v73 = vsub.s32 2, %v72
    %v74 = vrot.slane %v61, %v73
    %v75 = vlaneseq
    %v76 = vshrl.u32 %v75, 7
    %v77 = vsub.s32 3, %v76
    %v78 = vrot.slane %v61, %v77
    %vm83 = vcmask 261120
    %v85 = vsel %vm83, %v43, 0
    %v88 = vsel %vm83, %v44, 0
    %90 = vmatprep.subr.mxu0 %v46
    %91 = vmatpush1.msra.mxu0 %v45
    %92 = vmatprep.subr.mxu0 %v50
    %93 = vmatpush1.msra.mxu0 %v49
    %94 = vmatprep.subr.mxu0 %v54
    %95 = vmatpush1.msra.mxu0 %v53
    %96 = vmatprep.subr.mxu0 %v58
    %97 = vmatpush1.msra.mxu0 %v57
    %98 = vmatprep.subr.mxu0 0.0
    %99 = vmatpush1.msra.mxu0 0.0
    %100 = vmatprep.subr.mxu0 0.0
    %101 = vmatpush1.msra.mxu0 0.0
    %102 = vmatprep.subr.mxu0 0.0
    %103 = vmatpush1.msra.mxu0 0.0
    %104 = vmatprep.subr.mxu0 0.0
    %105 = vmatpush1.msra.mxu0 0.0
    %106 = vmatprep.subr.mxu0 0.0
    %107 = vmatpush1.msra.mxu0 0.0
    %108 = vmatprep.subr.mxu0 0.0
    %109 = vmatpush1.msra.mxu0 0.0
    %110 = vmatprep.subr.mxu0 0.0
    %111 = vmatpush1.msra.mxu0 0.0
    %112 = vmatprep.subr.mxu0 0.0
    %113 = vmatpush1.msra.mxu0 0.0
    %114 = vmatprep.subr.mxu0 0.0
    %115 = vmatpush1.msra.mxu0 0.0
    %116 = vmatprep.subr.mxu0 0.0
    %117 = vmatpush1.msra.mxu0 0.0
    %118 = vmatprep.subr.mxu0 0.0
    %119 = vmatpush1.msra.mxu0 0.0
    %120 = vmatprep.subr.mxu0 0.0
    %121 = vmatpush1.msra.mxu0 0.0
    %122 = vmatprep.subr.mxu0 0.0
    %123 = vmatpush1.msra.mxu0 0.0
    %124 = vmatprep.subr.mxu0 0.0
    %125 = vmatpush1.msra.mxu0 0.0
    %126 = vmatprep.subr.mxu0 0.0
    %127 = vmatpush1.msra.mxu0 0.0
    %128 = vmatprep.subr.mxu0 0.0
    %129 = vmatpush1.msra.mxu0 0.0
    %130 = vmatprep.subr.mxu0 0.0
    %131 = vmatpush1.msra.mxu0 0.0
    %132 = vmatprep.subr.mxu0 0.0
    %133 = vmatpush1.msra.mxu0 0.0
    %134 = vmatprep.subr.mxu0 0.0
    %135 = vmatpush1.msra.mxu0 0.0
    %136 = vmatprep.subr.mxu0 0.0
    %137 = vmatpush1.msra.mxu0 0.0
    %138 = vmatprep.subr.mxu0 0.0
    %139 = vmatpush1.msra.mxu0 0.0
    %140 = vmatprep.subr.mxu0 0.0
    %141 = vmatpush1.msra.mxu0 0.0
    %142 = vmatprep.subr.mxu0 0.0
    %143 = vmatpush1.msra.mxu0 0.0
    %144 = vmatprep.subr.mxu0 0.0
    %145 = vmatpush1.msra.mxu0 0.0
    %146 = vmatprep.subr.mxu0 0.0
    %147 = vmatpush1.msra.mxu0 0.0
    %148 = vmatprep.subr.mxu0 0.0
    %149 = vmatpush1.msra.mxu0 0.0
    %150 = vmatprep.subr.mxu0 0.0
    %151 = vmatpush1.msra.mxu0 0.0
    %152 = vmatprep.subr.mxu0 0.0
    %153 = vmatpush1.msra.mxu0 0.0
    %154 = vmatprep.mubr.f32.mxu0 0.0
    %155 = vmatmul.mubr.f32.gmra.mrb[0].mxu0 %v85
    %v156 = vpop.f32.mrb[0].mxu0
    %v157 = vadd.f32 %v66, %v156
    %v158 = vpop.f32.mrb[0].mxu0
    %v159 = vadd.f32 %v70, %v158
    %160 = vmatprep.mubr.f32.mxu0 0.0
    %161 = vmatmul.mubr.f32.gmra.mrb[0].mxu0 %v88
    %v162 = vpop.f32.mrb[0].mxu0
    %v163 = vadd.f32 %v66, %v162
    %v164 = vpop.f32.mrb[0].mxu0
    %v165 = vadd.f32 %v70, %v164
    %166 = vdwg.mxu0
    %167 = vmatprep.subr.mxu0 %v48
    %168 = vmatpush1.msra.mxu0 %v47
    %169 = vmatprep.subr.mxu0 %v52
    %170 = vmatpush1.msra.mxu0 %v51
    %171 = vmatprep.subr.mxu0 %v56
    %172 = vmatpush1.msra.mxu0 %v55
    %173 = vmatprep.subr.mxu0 %v60
    %174 = vmatpush1.msra.mxu0 %v59
    %175 = vmatprep.subr.mxu0 0.0
    %176 = vmatpush1.msra.mxu0 0.0
    %177 = vmatprep.subr.mxu0 0.0
    %178 = vmatpush1.msra.mxu0 0.0
    %179 = vmatprep.subr.mxu0 0.0
    %180 = vmatpush1.msra.mxu0 0.0
    %181 = vmatprep.subr.mxu0 0.0
    %182 = vmatpush1.msra.mxu0 0.0
    %183 = vmatprep.subr.mxu0 0.0
    %184 = vmatpush1.msra.mxu0 0.0
    %185 = vmatprep.subr.mxu0 0.0
    %186 = vmatpush1.msra.mxu0 0.0
    %187 = vmatprep.subr.mxu0 0.0
    %188 = vmatpush1.msra.mxu0 0.0
    %189 = vmatprep.subr.mxu0 0.0
    %190 = vmatpush1.msra.mxu0 0.0
    %191 = vmatprep.subr.mxu0 0.0
    %192 = vmatpush1.msra.mxu0 0.0
    %193 = vmatprep.subr.mxu0 0.0
    %194 = vmatpush1.msra.mxu0 0.0
    %195 = vmatprep.subr.mxu0 0.0
    %196 = vmatpush1.msra.mxu0 0.0
    %197 = vmatprep.subr.mxu0 0.0
    %198 = vmatpush1.msra.mxu0 0.0
    %199 = vmatprep.subr.mxu0 0.0
    %200 = vmatpush1.msra.mxu0 0.0
    %201 = vmatprep.subr.mxu0 0.0
    %202 = vmatpush1.msra.mxu0 0.0
    %203 = vmatprep.subr.mxu0 0.0
    %204 = vmatpush1.msra.mxu0 0.0
    %205 = vmatprep.subr.mxu0 0.0
    %206 = vmatpush1.msra.mxu0 0.0
    %207 = vmatprep.subr.mxu0 0.0
    %208 = vmatpush1.msra.mxu0 0.0
    %209 = vmatprep.subr.mxu0 0.0
    %210 = vmatpush1.msra.mxu0 0.0
    %211 = vmatprep.subr.mxu0 0.0
    %212 = vmatpush1.msra.mxu0 0.0
    %213 = vmatprep.subr.mxu0 0.0
    %214 = vmatpush1.msra.mxu0 0.0
    %215 = vmatprep.subr.mxu0 0.0
    %216 = vmatpush1.msra.mxu0 0.0
    %217 = vmatprep.subr.mxu0 0.0
    %218 = vmatpush1.msra.mxu0 0.0
    %219 = vmatprep.subr.mxu0 0.0
    %220 = vmatpush1.msra.mxu0 0.0
    %221 = vmatprep.subr.mxu0 0.0
    %222 = vmatpush1.msra.mxu0 0.0
    %223 = vmatprep.subr.mxu0 0.0
    %224 = vmatpush1.msra.mxu0 0.0
    %225 = vmatprep.subr.mxu0 0.0
    %226 = vmatpush1.msra.mxu0 0.0
    %227 = vmatprep.subr.mxu0 0.0
    %228 = vmatpush1.msra.mxu0 0.0
    %229 = vmatprep.subr.mxu0 0.0
    %230 = vmatpush1.msra.mxu0 0.0
    %231 = vmatprep.mubr.f32.mxu0 0.0
    %232 = vmatmul.mubr.f32.gmra.mrb[0].mxu0 %v85
    %v233 = vpop.f32.mrb[0].mxu0
    %v234 = vadd.f32 %v74, %v233
    %v235 = vpop.f32.mrb[0].mxu0
    %v236 = vadd.f32 %v78, %v235
    %237 = vmatprep.mubr.f32.mxu0 0.0
    %238 = vmatmul.mubr.f32.gmra.mrb[0].mxu0 %v88
    %v239 = vpop.f32.mrb[0].mxu0
    %v240 = vadd.f32 %v74, %v239
    %v241 = vpop.f32.mrb[0].mxu0
    %v242 = vadd.f32 %v78, %v241
    %243 = vdwg.mxu0
    %v244 = vmax.f32 %v157, %v159
    %v245 = vmax.f32 %v163, %v165
    %v246 = vmax.f32 %v244, %v234
    %v247 = vmax.f32 %v245, %v240
    %v248 = vmax.f32 %v246, %v236
    %v249 = vmax.f32 %v247, %v242
    %250 = vst [vmem:[#allocation7] sm:$0xff] %v248
    %251 = vst [vmem:[#allocation7 + $0x8] sm:$0xff] %v249
    // Predicated region
    $region22: #{tpu_custom_call.1} parent=1 // pred_check
      _
    $region23: #{tpu_custom_call.1} parent=1 // pred_check_branch
      %253 = sbr.rel (0) target = $region25
    $region24: #{tpu_custom_call.1} parent=1 // pred_region
      %s255 = ssub.s32 256, 256
      %256 = vsyncadd [#allocation4], %s255
      %s257 = sshll.u32 [#allocation7], 4
      %s258 = int_to_ptr.vmem [resolvable:$true] %s257
      %263 = dma.vmem_to_hbm [thread:$0]  %s258, 256, %s3, [#allocation4], 128, 128, 8
    $region25: #{tpu_custom_call.1} parent=1 // pred_fallthru
      _
    // Predicated region
    $region26: #{tpu_custom_call.1} parent=1 // pred_check
      _
    $region27: #{tpu_custom_call.1} parent=1 // pred_check_branch
      %265 = sbr.rel (0) target = $region29
    $region28: #{tpu_custom_call.1} parent=1 // pred_region
      %266 = dma.done [#allocation4], 256
    $region29: #{tpu_custom_call.1} parent=1 // pred_fallthru
      _
    %267 = vsyncpa [#allocation3], 1
    %268 = vsyncpa [#allocation6], 1
    %269 = vsyncpa [#allocation4], 1

</llo_original>
